<compile_context>
chip_gen: v7x
topology: tpu7x:2x2x1
jax: 0.10.0
libtpu: 0.0.40
codegen_flags: <defaults>
</compile_context>

<pallas_src>
import functools

import jax
import jax.numpy as jnp
import numpy as np
from jax.experimental import pallas as pl
from jax.experimental.pallas import tpu as pltpu

_LANE = 128
_SUBLANE = 8
_ITEM = 4                                # f32 bytes
_VMEM_BUDGET = 32 * 1024 * 1024          # working-set budget, safe on v5e/v6e/v7x
_MAX_TM = 2048                           # row cap (lifted from 512 per review)


def _round_up(x, m):
    return ((x + m - 1) // m) * m


def _cdiv(a, b):
    return (a + b - 1) // b


# ---------------------------------------------------------------------------
# Kernels
# ---------------------------------------------------------------------------
def _linear_kernel(x_ref, w_ref, o_ref):
    # One MXU op per grid step: [TM, d] @ [d, C] -> [TM, C]
    o_ref[...] = jnp.dot(
        x_ref[...], w_ref[...], preferred_element_type=jnp.float32
    ).astype(o_ref.dtype)


def _linear_kernel_ktiled(x_ref, w_ref, o_ref, acc_ref):
    # Streamed-weight variant: accumulate partial products over the K (dim) axis.
    @pl.when(pl.program_id(1) == 0)
    def _():
        acc_ref[...] = jnp.zeros_like(acc_ref)

    acc_ref[...] += jnp.dot(
        x_ref[...], w_ref[...], preferred_element_type=jnp.float32
    )

    @pl.when(pl.program_id(1) == pl.num_programs(1) - 1)
    def _():
        o_ref[...] = acc_ref[...].astype(o_ref.dtype)


# ---------------------------------------------------------------------------
# Wrapper helpers
# ---------------------------------------------------------------------------
def format_weight(weight):
    """Pre-format fc.weight ([num_class, dim], torch layout) ONCE, outside the
    per-call hot path: transpose to [dim, C]; lane-pad the class dim to 128 only
    when the padded output writeback is cheap relative to the x read stream."""
    num_class, d = weight.shape
    c_pad = _round_up(num_class, _LANE)
    # Dense-vst padding only when extra output bytes are <= ~25% of the x bytes/row;
    # for tiny num_class with small dim, masked stores on the true width win.
    use_pad = (c_pad == num_class) or (d >= 4 * c_pad)
    if use_pad and c_pad != num_class:
        w_t = jnp.zeros((d, c_pad), jnp.float32).at[:, :num_class].set(
            jnp.asarray(weight, jnp.float32).T
        )
    else:
        w_t = jnp.asarray(weight, jnp.float32).T
    return w_t, num_class


def _choose_tiles(n_rows, d, C, force_k_tiling=False):
    """Pick (tm, tk, k_tiled) so that x(2-buf) + weight + out(2-buf) [+acc] fit
    the working-set budget on every generation."""
    n_rounded = _round_up(max(n_rows, 1), _SUBLANE)
    w_bytes = d * C * _ITEM
    k_tiled = force_k_tiling or (w_bytes > _VMEM_BUDGET // 2)

    if not k_tiled:
        # 2*tm*d (x) + d*C (weight, single-buffered) + 2*tm*C (out)  <= budget
        avail = _VMEM_BUDGET - w_bytes
        tm = avail // (2 * _ITEM * (d + C))
        tk = d
    else:
        tk = min(_round_up(d, _LANE), 512)
        while 2 * tk * C * _ITEM > _VMEM_BUDGET // 2 and tk > _LANE:
            tk = max(_LANE, (tk // 2 // _LANE) * _LANE)
        rem = max(_VMEM_BUDGET - 2 * tk * C * _ITEM, 0)
        # 2*tm*tk (x) + 2*tm*C (out) + tm*C (acc f32)  <= remainder
        tm = rem // (_ITEM * (2 * tk + 3 * C))

    tm = max(_SUBLANE, (tm // _SUBLANE) * _SUBLANE)
    tm = min(tm, _MAX_TM, n_rounded)
    # v7x megacore: ensure >=2 batch tiles (when splittable) so both TCs get work.
    if n_rounded // tm < 2 and n_rows > _SUBLANE:
        tm = max(_SUBLANE, _round_up(_cdiv(n_rounded, 2), _SUBLANE))
    return tm, tk, k_tiled


def _vmem_limit_bytes(tm, tk, d, C, k_tiled):
    if k_tiled:
        ws = (2 * tm * tk + 2 * tk * C + 2 * tm * C + tm * C) * _ITEM
    else:
        ws = (2 * tm * d + d * C + 2 * tm * C) * _ITEM
    # Generous headroom for Mosaic internal scratch; cap below v7x's 64 MiB physical.
    return int(min(48 * 1024 * 1024,
                   max(16 * 1024 * 1024, ws + max(ws // 2, 4 * 1024 * 1024))))


def mlp_classifier_forward_formatted(x, w_t, num_class, *, tm=None, tk=None,
                                     force_k_tiling=False):
    """x: [N, dim] f32, w_t: pre-formatted [dim, C] (C = num_class or lane-padded).

    Returns logits [N, num_class] == x @ weight.T (no bias).
    """
    N, d = x.shape
    dw, C = w_t.shape
    assert d == dw, (d, dw)

    auto_tm, auto_tk, k_tiled = _choose_tiles(N, d, C, force_k_tiling)
    tm = auto_tm if tm is None else max(_SUBLANE, _round_up(tm, _SUBLANE))
    tk = auto_tk if tk is None else max(_SUBLANE, _round_up(tk, _SUBLANE))

    n_pad = _round_up(N, tm)
    if n_pad != N:
        x = jnp.pad(x, ((0, n_pad - N), (0, 0)))
    grid_m = n_pad // tm

    if not k_tiled:
        flops = 2 * n_pad * d * C
        bytes_accessed = _ITEM * (n_pad * d + d * C + n_pad * C)

        def build(single_buffer_weight):
            w_kwargs = {}
            if single_buffer_weight:
                # Constant index_map -> the weight stays VMEM-resident; one buffer.
                w_kwargs["pipeline_mode"] = pl.Buffered(1)
            return pl.pallas_call(
                _linear_kernel,
                out_shape=jax.ShapeDtypeStruct((n_pad, C), jnp.float32),
                grid_spec=pltpu.PrefetchScalarGridSpec(
                    num_scalar_prefetch=0,
                    grid=(grid_m,),
                    in_specs=[
                        pl.BlockSpec((tm, d), lambda i: (i, 0)),     # x, pipelined over N
                        pl.BlockSpec((d, C), lambda i: (0, 0), **w_kwargs),
                    ],
                    out_specs=pl.BlockSpec((tm, C), lambda i: (i, 0)),
                ),
                compiler_params=pltpu.CompilerParams(
                    dimension_semantics=("parallel",),
                    vmem_limit_bytes=_vmem_limit_bytes(tm, d, d, C, False),
                ),
                cost_estimate=pl.CostEstimate(
                    flops=flops, transcendentals=0, bytes_accessed=bytes_accessed),
            )

        try:
            out = build(True)(x, w_t)
        except Exception:  # jax build without single-buffer support: default buffering
            out = build(False)(x, w_t)
    else:
        d_pad = _round_up(d, tk)
        if d_pad != d:
            x = jnp.pad(x, ((0, 0), (0, d_pad - d)))
            w_t = jnp.pad(w_t, ((0, d_pad - d), (0, 0)))
        grid_k = d_pad // tk
        flops = 2 * n_pad * d_pad * C
        bytes_accessed = _ITEM * (n_pad * d_pad + d_pad * C + n_pad * C)

        out = pl.pallas_call(
            _linear_kernel_ktiled,
            out_shape=jax.ShapeDtypeStruct((n_pad, C), jnp.float32),
            grid_spec=pltpu.PrefetchScalarGridSpec(
                num_scalar_prefetch=0,
                grid=(grid_m, grid_k),                        # K (reduction) axis last
                in_specs=[
                    pl.BlockSpec((tm, tk), lambda i, k: (i, k)),
                    pl.BlockSpec((tk, C), lambda i, k: (k, 0)),
                ],
                out_specs=pl.BlockSpec((tm, C), lambda i, k: (i, 0)),
                scratch_shapes=[pltpu.VMEM((tm, C), jnp.float32)],
            ),
            compiler_params=pltpu.CompilerParams(
                dimension_semantics=("parallel", "arbitrary"),
                vmem_limit_bytes=_vmem_limit_bytes(tm, tk, d_pad, C, True),
            ),
            cost_estimate=pl.CostEstimate(
                flops=flops, transcendentals=0, bytes_accessed=bytes_accessed),
        )(x, w_t)

    # Strip batch padding and (if present) lane padding of the class dim.
    if n_pad != N or C != num_class:
        out = out[:N, :num_class]
    return out


def mlp_classifier_forward(x, weight, **kw):
    """Convenience one-shot wrapper (weight in torch [num_class, dim] layout)."""
    w_t, num_class = format_weight(weight)
    return mlp_classifier_forward_formatted(x, w_t, num_class, **kw)


def make_mlp_classifier_forward(weight, **kw):
    """Format the parameter once (hoists the transpose/pad out of the hot loop) and
    return a forward function of x."""
    w_t, num_class = format_weight(weight)
    return functools.partial(
        mlp_classifier_forward_formatted, w_t=w_t, num_class=num_class, **kw)


if __name__ == "__main__":
    key = jax.random.PRNGKey(0)
    k_w, k_x, k_w2, k_x2 = jax.random.split(key, 4)

    # --- Test 1: module's own config (dim=32, num_class=4, batch N=16) ------------
    N, dim, num_class = 16, 32, 4
    bound = 1.0 / np.sqrt(dim)
    weight = jax.random.uniform(
        k_w, (num_class, dim), jnp.float32, minval=-bound, maxval=bound)
    x = jax.random.normal(k_x, (N, dim), jnp.float32)

    fwd = make_mlp_classifier_forward(weight)     # weight formatted once, not per call
    out = jax.block_until_ready(fwd(x))
    ref = x @ weight.T
    assert out.shape == (N, num_class)
    np.testing.assert_allclose(np.asarray(out), np.asarray(ref), rtol=1e-5, atol=1e-5)

    # --- Test 2: exercise the streamed-weight (K-tiled accumulator) path ----------
    N2, dim2, nc2 = 64, 256, 8
    bound2 = 1.0 / np.sqrt(dim2)
    w2 = jax.random.uniform(
        k_w2, (nc2, dim2), jnp.float32, minval=-bound2, maxval=bound2)
    x2 = jax.random.normal(k_x2, (N2, dim2), jnp.float32)
    out2 = jax.block_until_ready(
        mlp_classifier_forward(x2, w2, tm=32, tk=128, force_k_tiling=True))
    ref2 = x2 @ w2.T
    assert out2.shape == (N2, nc2)
    np.testing.assert_allclose(np.asarray(out2), np.asarray(ref2), rtol=1e-4, atol=1e-4)

    print("KERNEL_OK")
</pallas_src>

<mosaic_0001>
module attributes {stable_mosaic.version = 11 : i64} {
  func.func @_linear_kernel(%arg0: i32, %arg1: memref<8x32xf32, #tpu.memory_space<vmem>>, %arg2: memref<32x4xf32, #tpu.memory_space<vmem>>, %arg3: memref<8x4xf32, #tpu.memory_space<vmem>>) attributes {dimension_semantics = [#tpu.dimension_semantics<parallel>], iteration_bounds = array<i64: 2>, scalar_prefetch = 0 : i64, scratch_operands = 0 : i64, tpu.core_type = #tpu.core_type<tc>, window_params = [{transform_indices = @transform_0, window_bounds = array<i64: 8, 32>}, {pipeline_mode = #tpu.pipeline_mode<synchronous>, transform_indices = @transform_1, window_bounds = array<i64: 32, 4>}, {transform_indices = @transform_2, window_bounds = array<i64: 8, 4>}]} {
    %c0 = arith.constant 0 : index
    %c0_0 = arith.constant 0 : index
    %0 = vector.load %arg1[%c0, %c0_0] : memref<8x32xf32, #tpu.memory_space<vmem>>, vector<8x32xf32>
    %c0_1 = arith.constant 0 : index
    %c0_2 = arith.constant 0 : index
    %1 = vector.load %arg2[%c0_1, %c0_2] : memref<32x4xf32, #tpu.memory_space<vmem>>, vector<32x4xf32>
    %cst = arith.constant dense<0.000000e+00> : vector<8x4xf32>
    %2 = tpu.matmul %0, %1, %cst {dimension_numbers = #tpu.dot_dimension_numbers<[1], [0], [0], [1], [0, 0, 1, 1], [], []>} : vector<8x32xf32>, vector<32x4xf32>, vector<8x4xf32> -> vector<8x4xf32>
    %c0_3 = arith.constant 0 : index
    %c0_4 = arith.constant 0 : index
    %3 = vector.load %arg3[%c0_3, %c0_4] : memref<8x4xf32, #tpu.memory_space<vmem>>, vector<8x4xf32>
    tpu.vector_store %arg3[%c0_3, %c0_4], %2 {strides = array<i32>} : memref<8x4xf32, #tpu.memory_space<vmem>>, vector<8x4xf32>,
    return
  }
  func.func @transform_0(%arg0: i32) -> (i32, i32) {
    %c0_i32 = arith.constant 0 : i32
    %c0_i32_0 = arith.constant 0 : i32
    return %arg0, %c0_i32 : i32, i32
  }
  func.func @transform_1(%arg0: i32) -> (i32, i32) {
    %c0_i32 = arith.constant 0 : i32
    %c0_i32_0 = arith.constant 0 : i32
    %c0_i32_1 = arith.constant 0 : i32
    return %c0_i32, %c0_i32_0 : i32, i32
  }
  func.func @transform_2(%arg0: i32) -> (i32, i32) {
    %c0_i32 = arith.constant 0 : i32
    %c0_i32_0 = arith.constant 0 : i32
    return %arg0, %c0_i32 : i32, i32
  }
}

module attributes {stable_mosaic.version = 11 : i64} {
  func.func @_linear_kernel(%arg0: i32, %arg1: memref<8x32xf32, #tpu.memory_space<vmem>>, %arg2: memref<32x4xf32, #tpu.memory_space<vmem>>, %arg3: memref<8x4xf32, #tpu.memory_space<vmem>>) attributes {dimension_semantics = [#tpu.dimension_semantics<parallel>], iteration_bounds = array<i64: 2>, scalar_prefetch = 0 : i64, scratch_operands = 0 : i64, tpu.core_type = #tpu.core_type<tc>, window_params = [{transform_indices = @transform_0, window_bounds = array<i64: 8, 32>}, {pipeline_mode = #tpu.pipeline_mode<synchronous>, transform_indices = @transform_1, window_bounds = array<i64: 32, 4>}, {transform_indices = @transform_2, window_bounds = array<i64: 8, 4>}]} {
    %c0 = arith.constant 0 : index
    %c0_0 = arith.constant 0 : index
    %0 = vector.load %arg1[%c0, %c0_0] : memref<8x32xf32, #tpu.memory_space<vmem>>, vector<8x32xf32>
    %c0_1 = arith.constant 0 : index
    %c0_2 = arith.constant 0 : index
    %1 = vector.load %arg2[%c0_1, %c0_2] : memref<32x4xf32, #tpu.memory_space<vmem>>, vector<32x4xf32>
    %cst = arith.constant dense<0.000000e+00> : vector<8x4xf32>
    %2 = tpu.matmul %0, %1, %cst {dimension_numbers = #tpu.dot_dimension_numbers<[1], [0], [0], [1], [0, 0, 1, 1], [], []>} : vector<8x32xf32>, vector<32x4xf32>, vector<8x4xf32> -> vector<8x4xf32>
    %c0_3 = arith.constant 0 : index
    %c0_4 = arith.constant 0 : index
    %3 = vector.load %arg3[%c0_3, %c0_4] : memref<8x4xf32, #tpu.memory_space<vmem>>, vector<8x4xf32>
    tpu.vector_store %arg3[%c0_3, %c0_4], %2 {strides = array<i32>} : memref<8x4xf32, #tpu.memory_space<vmem>>, vector<8x4xf32>,
    return
  }
  func.func @transform_0(%arg0: i32) -> (i32, i32) {
    %c0_i32 = arith.constant 0 : i32
    %c0_i32_0 = arith.constant 0 : i32
    return %arg0, %c0_i32 : i32, i32
  }
  func.func @transform_1(%arg0: i32) -> (i32, i32) {
    %c0_i32 = arith.constant 0 : i32
    %c0_i32_0 = arith.constant 0 : i32
    %c0_i32_1 = arith.constant 0 : i32
    return %c0_i32, %c0_i32_0 : i32, i32
  }
  func.func @transform_2(%arg0: i32) -> (i32, i32) {
    %c0_i32 = arith.constant 0 : i32
    %c0_i32_0 = arith.constant 0 : i32
    return %arg0, %c0_i32 : i32, i32
  }
}

</mosaic_0001>

<llo_original>
// kernel: tpu_custom_call.1
$region0: #{tpu_custom_call.1}
  #allocation0 [shape = 'u32[]', space=smem, size = 0x4, offset = 0x4, fixed_abs, tag = 'smem constant byte address 0x4 - core index']
  #allocation1 [shape = 'u32[144,128]{1,0:T(1,128)}', space=vmem, size = 0x12000, scoped, tag = 'internal scratch']
  %s0 = inlined_call_operand.vmem [shape: f32[16,32], index: 0, kind: input, shape index: {}]
  %s1 = inlined_call_operand.vmem [shape: f32[32,4], index: 1, kind: input, shape index: {}]
  %s2 = inlined_call_operand.vmem [shape: f32[16,4], index: 2, kind: output, shape index: {}]
  %s3 = sld [smem:[#allocation0]]
  $region41: #{tpu_custom_call.1} parent=0
    _
  %s5 = ssub.s32 1, %s3
  %s6 = scalar_select 0, %s5, %s3
  loop: start=0, step=1, limit=4
  $region2: #{tpu_custom_call.1} parent=0 // loop_pre_header
    _
  $region3: #{tpu_custom_call.1} parent=0 // loop_header
    %s8 = sphi 0, %s12
    %p9 = scmp.ge.s32.totalorder %s8, 4
    %s18 = sphi 0, %s20
    %s21 = sphi 0, %s18
    %s22 = sphi 0, %s21
    %s38 = sphi 0, %s22
    %s42 = sphi 0, %s42
    %s44 = sphi 0, %s42
    %s45 = sphi 0, %s44
    %s59 = sphi 0, %s45
    %s65 = sphi 0, %s67
    %s68 = sphi 0, %s65
    %s69 = sphi 0, %s68
    %s85 = sphi 0, %s69
  $region4: #{tpu_custom_call.1} parent=0 // loop_header_branch
    %11 = sbr.rel (%p9) target = $region8
  $region5: #{tpu_custom_call.1} parent=0 // loop_body
    %s13 = ssub.s32 %s8, 1
    %s14 = ssub.s32 %s8, 2
    %s15 = sadd.s32 %s8, 1
    %s16 = ssub.s32 %s8, %s15
    %p17 = scmp.eq.s32.totalorder %s16, 0
    %s19 = sadd.s32 %s18, 1
    %s20 = scalar_select %p17, %s18, %s19
    %p23 = pneg %p17
    %p24 = scmp.eq.s32.totalorder %s8, 1
    %p25 = por %p23, %p24
    %p26 = scmp.ne.s32.totalorder %s18, %s21
    %p27 = scmp.eq.s32.totalorder %s8, 0
    %p28 = por %p26, %p27
    %p29 = scmp.ne.s32.totalorder %s18, %s21
    %p30 = scmp.eq.s32.totalorder %s13, 1
    %p31 = por %p29, %p30
    %p32 = scmp.ne.s32.totalorder %s21, %s22
    %p33 = scmp.eq.s32.totalorder %s13, 0
    %p34 = por %p32, %p33
    %p35 = scmp.ne.s32.totalorder %s21, %s22
    %p36 = scmp.eq.s32.totalorder %s14, 1
    %p37 = por %p35, %p36
    %p39 = scmp.ne.s32.totalorder %s22, %s38
    %p40 = scmp.eq.s32.totalorder %s14, 0
    %p41 = por %p39, %p40
    %s43 = sadd.s32 %s42, 1
    %p46 = scmp.eq.s32.totalorder %s8, 1
    %p47 = scmp.ne.s32.totalorder %s42, %s44
    %p48 = scmp.eq.s32.totalorder %s8, 0
    %p49 = por %p47, %p48
    %p50 = scmp.ne.s32.totalorder %s42, %s44
    %p51 = scmp.eq.s32.totalorder %s13, 1
    %p52 = por %p50, %p51
    %p53 = scmp.ne.s32.totalorder %s44, %s45
    %p54 = scmp.eq.s32.totalorder %s13, 0
    %p55 = por %p53, %p54
    %p56 = scmp.ne.s32.totalorder %s44, %s45
    %p57 = scmp.eq.s32.totalorder %s14, 1
    %p58 = por %p56, %p57
    %p60 = scmp.ne.s32.totalorder %s45, %s59
    %p61 = scmp.eq.s32.totalorder %s14, 0
    %p62 = por %p60, %p61
    %s63 = ssub.s32 %s8, %s15
    %p64 = scmp.eq.s32.totalorder %s63, 0
    %s66 = sadd.s32 %s65, 1
    %s67 = scalar_select %p64, %s65, %s66
    %p70 = pneg %p64
    %p71 = scmp.eq.s32.totalorder %s8, 1
    %p72 = por %p70, %p71
    %p73 = scmp.ne.s32.totalorder %s65, %s68
    %p74 = scmp.eq.s32.totalorder %s8, 0
    %p75 = por %p73, %p74
    %p76 = scmp.ne.s32.totalorder %s65, %s68
    %p77 = scmp.eq.s32.totalorder %s13, 1
    %p78 = por %p76, %p77
    %p79 = scmp.ne.s32.totalorder %s68, %s69
    %p80 = scmp.eq.s32.totalorder %s13, 0
    %p81 = por %p79, %p80
    %p82 = scmp.ne.s32.totalorder %s68, %s69
    %p83 = scmp.eq.s32.totalorder %s14, 1
    %p84 = por %p82, %p83
    %p86 = scmp.ne.s32.totalorder %s69, %s85
    %p87 = scmp.eq.s32.totalorder %s14, 0
    %p88 = por %p86, %p87
    %p89 = scmp.le.s32.totalorder 1, %s8
    %p90 = scmp.lt.s32.totalorder %s8, 3
    %p91 = pnand %p89, %p90
    %p92 = pneg %p91
    // Predicated region
    $region9: #{tpu_custom_call.1} parent=5 // pred_check
      _
    $region10: #{tpu_custom_call.1} parent=5 // pred_check_branch
      %94 = sbr.rel (%p91) target = $region12
    $region11: #{tpu_custom_call.1} parent=5 // pred_region
      %s95 = ssub.s32 %s8, 1
      // Predicated region
      $region13: #{tpu_custom_call.1} parent=11 // pred_check
        %p96 = pneg %p55
      $region14: #{tpu_custom_call.1} parent=11 // pred_check_branch
        %98 = sbr.rel (%p96) target = $region16
      $region15: #{tpu_custom_call.1} parent=11 // pred_region
        _
      $region16: #{tpu_custom_call.1} parent=11 // pred_fallthru
        _
    $region12: #{tpu_custom_call.1} parent=5 // pred_fallthru
      _
    %p99 = scmp.lt.s32.totalorder %s8, 2
    // Predicated region
    $region17: #{tpu_custom_call.1} parent=5 // pred_check
      %p100 = pneg %p99
    $region18: #{tpu_custom_call.1} parent=5 // pred_check_branch
      %102 = sbr.rel (%p100) target = $region20
    $region19: #{tpu_custom_call.1} parent=5 // pred_region
      // Predicated region
      $region21: #{tpu_custom_call.1} parent=19 // pred_check
        %p103 = pneg %p28
      $region22: #{tpu_custom_call.1} parent=19 // pred_check_branch
        %105 = sbr.rel (%p103) target = $region24
      $region23: #{tpu_custom_call.1} parent=19 // pred_region
        %p106 = scmp.lt.s32.totalorder %s8, 1
        %s107 = scalar_select %p106, %s8, 1
        %s108 = smul.addr %s107, 8
        %s109 = scalar_lea.vmem %s0, %s108
      $region24: #{tpu_custom_call.1} parent=19 // pred_fallthru
        _
    $region20: #{tpu_custom_call.1} parent=5 // pred_fallthru
      _
    %p110 = scmp.le.s32.totalorder 1, %s8
    %p111 = scmp.lt.s32.totalorder %s8, 3
    %p112 = pnand %p110, %p111
    %p113 = pneg %p112
    // Predicated region
    $region25: #{tpu_custom_call.1} parent=5 // pred_check
      _
    $region26: #{tpu_custom_call.1} parent=5 // pred_check_branch
      %115 = sbr.rel (%p112) target = $region28
    $region27: #{tpu_custom_call.1} parent=5 // pred_region
      %s116 = ssub.s32 %s8, 1
      %p117 = scmp.lt.s32.totalorder %s13, 1
      %s118 = scalar_select %p117, %s13, 1
      %s119 = smul.addr %s118, 8
      %s120 = scalar_lea.vmem %s0, %s119
      %p121 = pneg %p34
      %p122 = pneg %p31
      %p123 = pneg %p55
      %p124 = pneg %p52
      %p125 = pneg %p81
      %p126 = pneg %p78
      %p127 = scmp.lt.s32.totalorder %s13, 1
      %s128 = scalar_select %p127, %s13, 1
      %s129 = smul.addr %s128, 8
      %s130 = scalar_lea.vmem %s2, %s129
      %p131 = scmp.lt.s32.totalorder %s13, 1
      %s132 = scalar_select %p131, %s13, 1
      %s133 = smul.addr %s132, 8
      %s134 = scalar_lea.vmem %s0, %s133
      %p135 = scmp.lt.s32.totalorder %s13, 1
      %s136 = scalar_select %p135, %s13, 1
      %s137 = smul.addr %s136, 8
      %s138 = scalar_lea.vmem %s2, %s137
      %v139 = vld [vmem:[%s134] sm:$0xff]
      %v140 = vld [vmem:[%s1] sm:$0xff]
      %v141 = vld [vmem:[%s1 + $0x8] sm:$0xff]
      %v142 = vld [vmem:[%s1 + $0x10] sm:$0xff]
      %v143 = vld [vmem:[%s1 + $0x18] sm:$0xff]
      %vm144 = vcmask 261120
      %v146 = vsel %vm144, %v139, 0
      %148 = vmatprep.subr.mxu0 0.0
      %149 = vmatpush1.msra.mxu0 %v140
      %150 = vmatprep.subr.mxu0 0.0
      %151 = vmatpush1.msra.mxu0 %v141
      %152 = vmatprep.subr.mxu0 0.0
      %153 = vmatpush1.msra.mxu0 %v142
      %154 = vmatprep.subr.mxu0 0.0
      %155 = vmatpush1.msra.mxu0 %v143
      %156 = vmatprep.subr.mxu0 0.0
      %157 = vmatpush1.msra.mxu0 0.0
      %158 = vmatprep.subr.mxu0 0.0
      %159 = vmatpush1.msra.mxu0 0.0
      %160 = vmatprep.subr.mxu0 0.0
      %161 = vmatpush1.msra.mxu0 0.0
      %162 = vmatprep.subr.mxu0 0.0
      %163 = vmatpush1.msra.mxu0 0.0
      %164 = vmatprep.subr.mxu0 0.0
      %165 = vmatpush1.msra.mxu0 0.0
      %166 = vmatprep.subr.mxu0 0.0
      %167 = vmatpush1.msra.mxu0 0.0
      %168 = vmatprep.subr.mxu0 0.0
      %169 = vmatpush1.msra.mxu0 0.0
      %170 = vmatprep.subr.mxu0 0.0
      %171 = vmatpush1.msra.mxu0 0.0
      %172 = vmatprep.subr.mxu0 0.0
      %173 = vmatpush1.msra.mxu0 0.0
      %174 = vmatprep.subr.mxu0 0.0
      %175 = vmatpush1.msra.mxu0 0.0
      %176 = vmatprep.subr.mxu0 0.0
      %177 = vmatpush1.msra.mxu0 0.0
      %178 = vmatprep.subr.mxu0 0.0
      %179 = vmatpush1.msra.mxu0 0.0
      %180 = vmatprep.subr.mxu0 0.0
      %181 = vmatpush1.msra.mxu0 0.0
      %182 = vmatprep.subr.mxu0 0.0
      %183 = vmatpush1.msra.mxu0 0.0
      %184 = vmatprep.subr.mxu0 0.0
      %185 = vmatpush1.msra.mxu0 0.0
      %186 = vmatprep.subr.mxu0 0.0
      %187 = vmatpush1.msra.mxu0 0.0
      %188 = vmatprep.subr.mxu0 0.0
      %189 = vmatpush1.msra.mxu0 0.0
      %190 = vmatprep.subr.mxu0 0.0
      %191 = vmatpush1.msra.mxu0 0.0
      %192 = vmatprep.subr.mxu0 0.0
      %193 = vmatpush1.msra.mxu0 0.0
      %194 = vmatprep.subr.mxu0 0.0
      %195 = vmatpush1.msra.mxu0 0.0
      %196 = vmatprep.subr.mxu0 0.0
      %197 = vmatpush1.msra.mxu0 0.0
      %198 = vmatprep.subr.mxu0 0.0
      %199 = vmatpush1.msra.mxu0 0.0
      %200 = vmatprep.subr.mxu0 0.0
      %201 = vmatpush1.msra.mxu0 0.0
      %202 = vmatprep.subr.mxu0 0.0
      %203 = vmatpush1.msra.mxu0 0.0
      %204 = vmatprep.subr.mxu0 0.0
      %205 = vmatpush1.msra.mxu0 0.0
      %206 = vmatprep.subr.mxu0 0.0
      %207 = vmatpush1.msra.mxu0 0.0
      %208 = vmatprep.subr.mxu0 0.0
      %209 = vmatpush1.msra.mxu0 0.0
      %210 = vmatprep.subr.mxu0 0.0
      %211 = vmatpush1.msra.mxu0 0.0
      %212 = vmatprep.mubr.f32.mxu0 0.0
      %213 = vmatmul.mubr.f32.gmra.mrb[0].mxu0 %v146
      %v214 = vpop.f32.mrb[0].mxu0
      %v215 = vadd.f32 0.0, %v214
      %v216 = vpop.f32.mrb[0].mxu0
      %217 = vdwg.mxu0
      %vm218 = vcmask 31744
      %219 = vst.msk [vmem:[%s138] sm:$0xff] %vm218, %v215
      %p220 = scmp.lt.s32.totalorder %s13, 1
      %s221 = scalar_select %p220, %s13, 1
      %s222 = smul.addr %s221, 8
      %s223 = scalar_lea.vmem %s2, %s222
      // Predicated region
      $region29: #{tpu_custom_call.1} parent=27 // pred_check
        %p224 = pneg %p78
      $region30: #{tpu_custom_call.1} parent=27 // pred_check_branch
        %226 = sbr.rel (%p224) target = $region32
      $region31: #{tpu_custom_call.1} parent=27 // pred_region
        _
      $region32: #{tpu_custom_call.1} parent=27 // pred_fallthru
        _
    $region28: #{tpu_custom_call.1} parent=5 // pred_fallthru
      _
    %p227 = scmp.le.s32.totalorder 2, %s8
    // Predicated region
    $region33: #{tpu_custom_call.1} parent=5 // pred_check
      %p228 = pneg %p227
    $region34: #{tpu_custom_call.1} parent=5 // pred_check_branch
      %230 = sbr.rel (%p228) target = $region36
    $region35: #{tpu_custom_call.1} parent=5 // pred_region
      %s231 = ssub.s32 %s8, 2
      // Predicated region
      $region37: #{tpu_custom_call.1} parent=35 // pred_check
        %p232 = pneg %p84
      $region38: #{tpu_custom_call.1} parent=35 // pred_check_branch
        %234 = sbr.rel (%p232) target = $region40
      $region39: #{tpu_custom_call.1} parent=35 // pred_region
        %p235 = scmp.lt.s32.totalorder %s14, 1
        %s236 = scalar_select %p235, %s14, 1
        %s237 = smul.addr %s236, 8
        %s238 = scalar_lea.vmem %s2, %s237
      $region40: #{tpu_custom_call.1} parent=35 // pred_fallthru
        _
    $region36: #{tpu_custom_call.1} parent=5 // pred_fallthru
      _
  $region6: #{tpu_custom_call.1} parent=0 // loop_footer
    %s12 = sadd.s32 1, %s8
  $region7: #{tpu_custom_call.1} parent=0 // loop_footer_branch
    %7 = sbr.rel target = $region3
  $region8: #{tpu_custom_call.1} parent=0 // loop_exit
    _

// kernel: tpu_custom_call.1
$region0: #{tpu_custom_call.1}
  #allocation0 [shape = 'u32[]', space=smem, size = 0x4, offset = 0x4, fixed_abs, tag = 'smem constant byte address 0x4 - core index']
  #allocation1 [shape = 'u32[144,128]{1,0:T(1,128)}', space=vmem, size = 0x12000, scoped, tag = 'internal scratch']
  %s0 = inlined_call_operand.vmem [shape: f32[16,32], index: 0, kind: input, shape index: {}]
  %s1 = inlined_call_operand.vmem [shape: f32[32,4], index: 1, kind: input, shape index: {}]
  %s2 = inlined_call_operand.vmem [shape: f32[16,4], index: 2, kind: output, shape index: {}]
  %s3 = sld [smem:[#allocation0]]
  $region41: #{tpu_custom_call.1} parent=0
    _
  %s5 = ssub.s32 1, %s3
  %s6 = scalar_select 0, %s5, %s3
  loop: start=0, step=1, limit=4
  $region2: #{tpu_custom_call.1} parent=0 // loop_pre_header
    _
  $region3: #{tpu_custom_call.1} parent=0 // loop_header
    %s8 = sphi 0, %s12
    %p9 = scmp.ge.s32.totalorder %s8, 4
    %s18 = sphi 0, %s20
    %s21 = sphi 0, %s18
    %s22 = sphi 0, %s21
    %s38 = sphi 0, %s22
    %s42 = sphi 0, %s42
    %s44 = sphi 0, %s42
    %s45 = sphi 0, %s44
    %s59 = sphi 0, %s45
    %s65 = sphi 0, %s67
    %s68 = sphi 0, %s65
    %s69 = sphi 0, %s68
    %s85 = sphi 0, %s69
  $region4: #{tpu_custom_call.1} parent=0 // loop_header_branch
    %11 = sbr.rel (%p9) target = $region8
  $region5: #{tpu_custom_call.1} parent=0 // loop_body
    %s13 = ssub.s32 %s8, 1
    %s14 = ssub.s32 %s8, 2
    %s15 = sadd.s32 %s8, 1
    %s16 = ssub.s32 %s8, %s15
    %p17 = scmp.eq.s32.totalorder %s16, 0
    %s19 = sadd.s32 %s18, 1
    %s20 = scalar_select %p17, %s18, %s19
    %p23 = pneg %p17
    %p24 = scmp.eq.s32.totalorder %s8, 1
    %p25 = por %p23, %p24
    %p26 = scmp.ne.s32.totalorder %s18, %s21
    %p27 = scmp.eq.s32.totalorder %s8, 0
    %p28 = por %p26, %p27
    %p29 = scmp.ne.s32.totalorder %s18, %s21
    %p30 = scmp.eq.s32.totalorder %s13, 1
    %p31 = por %p29, %p30
    %p32 = scmp.ne.s32.totalorder %s21, %s22
    %p33 = scmp.eq.s32.totalorder %s13, 0
    %p34 = por %p32, %p33
    %p35 = scmp.ne.s32.totalorder %s21, %s22
    %p36 = scmp.eq.s32.totalorder %s14, 1
    %p37 = por %p35, %p36
    %p39 = scmp.ne.s32.totalorder %s22, %s38
    %p40 = scmp.eq.s32.totalorder %s14, 0
    %p41 = por %p39, %p40
    %s43 = sadd.s32 %s42, 1
    %p46 = scmp.eq.s32.totalorder %s8, 1
    %p47 = scmp.ne.s32.totalorder %s42, %s44
    %p48 = scmp.eq.s32.totalorder %s8, 0
    %p49 = por %p47, %p48
    %p50 = scmp.ne.s32.totalorder %s42, %s44
    %p51 = scmp.eq.s32.totalorder %s13, 1
    %p52 = por %p50, %p51
    %p53 = scmp.ne.s32.totalorder %s44, %s45
    %p54 = scmp.eq.s32.totalorder %s13, 0
    %p55 = por %p53, %p54
    %p56 = scmp.ne.s32.totalorder %s44, %s45
    %p57 = scmp.eq.s32.totalorder %s14, 1
    %p58 = por %p56, %p57
    %p60 = scmp.ne.s32.totalorder %s45, %s59
    %p61 = scmp.eq.s32.totalorder %s14, 0
    %p62 = por %p60, %p61
    %s63 = ssub.s32 %s8, %s15
    %p64 = scmp.eq.s32.totalorder %s63, 0
    %s66 = sadd.s32 %s65, 1
    %s67 = scalar_select %p64, %s65, %s66
    %p70 = pneg %p64
    %p71 = scmp.eq.s32.totalorder %s8, 1
    %p72 = por %p70, %p71
    %p73 = scmp.ne.s32.totalorder %s65, %s68
    %p74 = scmp.eq.s32.totalorder %s8, 0
    %p75 = por %p73, %p74
    %p76 = scmp.ne.s32.totalorder %s65, %s68
    %p77 = scmp.eq.s32.totalorder %s13, 1
    %p78 = por %p76, %p77
    %p79 = scmp.ne.s32.totalorder %s68, %s69
    %p80 = scmp.eq.s32.totalorder %s13, 0
    %p81 = por %p79, %p80
    %p82 = scmp.ne.s32.totalorder %s68, %s69
    %p83 = scmp.eq.s32.totalorder %s14, 1
    %p84 = por %p82, %p83
    %p86 = scmp.ne.s32.totalorder %s69, %s85
    %p87 = scmp.eq.s32.totalorder %s14, 0
    %p88 = por %p86, %p87
    %p89 = scmp.le.s32.totalorder 1, %s8
    %p90 = scmp.lt.s32.totalorder %s8, 3
    %p91 = pnand %p89, %p90
    %p92 = pneg %p91
    // Predicated region
    $region9: #{tpu_custom_call.1} parent=5 // pred_check
      _
    $region10: #{tpu_custom_call.1} parent=5 // pred_check_branch
      %94 = sbr.rel (%p91) target = $region12
    $region11: #{tpu_custom_call.1} parent=5 // pred_region
      %s95 = ssub.s32 %s8, 1
      // Predicated region
      $region13: #{tpu_custom_call.1} parent=11 // pred_check
        %p96 = pneg %p55
      $region14: #{tpu_custom_call.1} parent=11 // pred_check_branch
        %98 = sbr.rel (%p96) target = $region16
      $region15: #{tpu_custom_call.1} parent=11 // pred_region
        _
      $region16: #{tpu_custom_call.1} parent=11 // pred_fallthru
        _
    $region12: #{tpu_custom_call.1} parent=5 // pred_fallthru
      _
    %p99 = scmp.lt.s32.totalorder %s8, 2
    // Predicated region
    $region17: #{tpu_custom_call.1} parent=5 // pred_check
      %p100 = pneg %p99
    $region18: #{tpu_custom_call.1} parent=5 // pred_check_branch
      %102 = sbr.rel (%p100) target = $region20
    $region19: #{tpu_custom_call.1} parent=5 // pred_region
      // Predicated region
      $region21: #{tpu_custom_call.1} parent=19 // pred_check
        %p103 = pneg %p28
      $region22: #{tpu_custom_call.1} parent=19 // pred_check_branch
        %105 = sbr.rel (%p103) target = $region24
      $region23: #{tpu_custom_call.1} parent=19 // pred_region
        %p106 = scmp.lt.s32.totalorder %s8, 1
        %s107 = scalar_select %p106, %s8, 1
        %s108 = smul.addr %s107, 8
        %s109 = scalar_lea.vmem %s0, %s108
      $region24: #{tpu_custom_call.1} parent=19 // pred_fallthru
        _
    $region20: #{tpu_custom_call.1} parent=5 // pred_fallthru
      _
    %p110 = scmp.le.s32.totalorder 1, %s8
    %p111 = scmp.lt.s32.totalorder %s8, 3
    %p112 = pnand %p110, %p111
    %p113 = pneg %p112
    // Predicated region
    $region25: #{tpu_custom_call.1} parent=5 // pred_check
      _
    $region26: #{tpu_custom_call.1} parent=5 // pred_check_branch
      %115 = sbr.rel (%p112) target = $region28
    $region27: #{tpu_custom_call.1} parent=5 // pred_region
      %s116 = ssub.s32 %s8, 1
      %p117 = scmp.lt.s32.totalorder %s13, 1
      %s118 = scalar_select %p117, %s13, 1
      %s119 = smul.addr %s118, 8
      %s120 = scalar_lea.vmem %s0, %s119
      %p121 = pneg %p34
      %p122 = pneg %p31
      %p123 = pneg %p55
      %p124 = pneg %p52
      %p125 = pneg %p81
      %p126 = pneg %p78
      %p127 = scmp.lt.s32.totalorder %s13, 1
      %s128 = scalar_select %p127, %s13, 1
      %s129 = smul.addr %s128, 8
      %s130 = scalar_lea.vmem %s2, %s129
      %p131 = scmp.lt.s32.totalorder %s13, 1
      %s132 = scalar_select %p131, %s13, 1
      %s133 = smul.addr %s132, 8
      %s134 = scalar_lea.vmem %s0, %s133
      %p135 = scmp.lt.s32.totalorder %s13, 1
      %s136 = scalar_select %p135, %s13, 1
      %s137 = smul.addr %s136, 8
      %s138 = scalar_lea.vmem %s2, %s137
      %v139 = vld [vmem:[%s134] sm:$0xff]
      %v140 = vld [vmem:[%s1] sm:$0xff]
      %v141 = vld [vmem:[%s1 + $0x8] sm:$0xff]
      %v142 = vld [vmem:[%s1 + $0x10] sm:$0xff]
      %v143 = vld [vmem:[%s1 + $0x18] sm:$0xff]
      %vm144 = vcmask 261120
      %v146 = vsel %vm144, %v139, 0
      %148 = vmatprep.subr.mxu0 0.0
      %149 = vmatpush1.msra.mxu0 %v140
      %150 = vmatprep.subr.mxu0 0.0
      %151 = vmatpush1.msra.mxu0 %v141
      %152 = vmatprep.subr.mxu0 0.0
      %153 = vmatpush1.msra.mxu0 %v142
      %154 = vmatprep.subr.mxu0 0.0
      %155 = vmatpush1.msra.mxu0 %v143
      %156 = vmatprep.subr.mxu0 0.0
      %157 = vmatpush1.msra.mxu0 0.0
      %158 = vmatprep.subr.mxu0 0.0
      %159 = vmatpush1.msra.mxu0 0.0
      %160 = vmatprep.subr.mxu0 0.0
      %161 = vmatpush1.msra.mxu0 0.0
      %162 = vmatprep.subr.mxu0 0.0
      %163 = vmatpush1.msra.mxu0 0.0
      %164 = vmatprep.subr.mxu0 0.0
      %165 = vmatpush1.msra.mxu0 0.0
      %166 = vmatprep.subr.mxu0 0.0
      %167 = vmatpush1.msra.mxu0 0.0
      %168 = vmatprep.subr.mxu0 0.0
      %169 = vmatpush1.msra.mxu0 0.0
      %170 = vmatprep.subr.mxu0 0.0
      %171 = vmatpush1.msra.mxu0 0.0
      %172 = vmatprep.subr.mxu0 0.0
      %173 = vmatpush1.msra.mxu0 0.0
      %174 = vmatprep.subr.mxu0 0.0
      %175 = vmatpush1.msra.mxu0 0.0
      %176 = vmatprep.subr.mxu0 0.0
      %177 = vmatpush1.msra.mxu0 0.0
      %178 = vmatprep.subr.mxu0 0.0
      %179 = vmatpush1.msra.mxu0 0.0
      %180 = vmatprep.subr.mxu0 0.0
      %181 = vmatpush1.msra.mxu0 0.0
      %182 = vmatprep.subr.mxu0 0.0
      %183 = vmatpush1.msra.mxu0 0.0
      %184 = vmatprep.subr.mxu0 0.0
      %185 = vmatpush1.msra.mxu0 0.0
      %186 = vmatprep.subr.mxu0 0.0
      %187 = vmatpush1.msra.mxu0 0.0
      %188 = vmatprep.subr.mxu0 0.0
      %189 = vmatpush1.msra.mxu0 0.0
      %190 = vmatprep.subr.mxu0 0.0
      %191 = vmatpush1.msra.mxu0 0.0
      %192 = vmatprep.subr.mxu0 0.0
      %193 = vmatpush1.msra.mxu0 0.0
      %194 = vmatprep.subr.mxu0 0.0
      %195 = vmatpush1.msra.mxu0 0.0
      %196 = vmatprep.subr.mxu0 0.0
      %197 = vmatpush1.msra.mxu0 0.0
      %198 = vmatprep.subr.mxu0 0.0
      %199 = vmatpush1.msra.mxu0 0.0
      %200 = vmatprep.subr.mxu0 0.0
      %201 = vmatpush1.msra.mxu0 0.0
      %202 = vmatprep.subr.mxu0 0.0
      %203 = vmatpush1.msra.mxu0 0.0
      %204 = vmatprep.subr.mxu0 0.0
      %205 = vmatpush1.msra.mxu0 0.0
      %206 = vmatprep.subr.mxu0 0.0
      %207 = vmatpush1.msra.mxu0 0.0
      %208 = vmatprep.subr.mxu0 0.0
      %209 = vmatpush1.msra.mxu0 0.0
      %210 = vmatprep.subr.mxu0 0.0
      %211 = vmatpush1.msra.mxu0 0.0
      %212 = vmatprep.mubr.f32.mxu0 0.0
      %213 = vmatmul.mubr.f32.gmra.mrb[0].mxu0 %v146
      %v214 = vpop.f32.mrb[0].mxu0
      %v215 = vadd.f32 0.0, %v214
      %v216 = vpop.f32.mrb[0].mxu0
      %217 = vdwg.mxu0
      %vm218 = vcmask 31744
      %219 = vst.msk [vmem:[%s138] sm:$0xff] %vm218, %v215
      %p220 = scmp.lt.s32.totalorder %s13, 1
      %s221 = scalar_select %p220, %s13, 1
      %s222 = smul.addr %s221, 8
      %s223 = scalar_lea.vmem %s2, %s222
      // Predicated region
      $region29: #{tpu_custom_call.1} parent=27 // pred_check
        %p224 = pneg %p78
      $region30: #{tpu_custom_call.1} parent=27 // pred_check_branch
        %226 = sbr.rel (%p224) target = $region32
      $region31: #{tpu_custom_call.1} parent=27 // pred_region
        _
      $region32: #{tpu_custom_call.1} parent=27 // pred_fallthru
        _
    $region28: #{tpu_custom_call.1} parent=5 // pred_fallthru
      _
    %p227 = scmp.le.s32.totalorder 2, %s8
    // Predicated region
    $region33: #{tpu_custom_call.1} parent=5 // pred_check
      %p228 = pneg %p227
    $region34: #{tpu_custom_call.1} parent=5 // pred_check_branch
      %230 = sbr.rel (%p228) target = $region36
    $region35: #{tpu_custom_call.1} parent=5 // pred_region
      %s231 = ssub.s32 %s8, 2
      // Predicated region
      $region37: #{tpu_custom_call.1} parent=35 // pred_check
        %p232 = pneg %p84
      $region38: #{tpu_custom_call.1} parent=35 // pred_check_branch
        %234 = sbr.rel (%p232) target = $region40
      $region39: #{tpu_custom_call.1} parent=35 // pred_region
        %p235 = scmp.lt.s32.totalorder %s14, 1
        %s236 = scalar_select %p235, %s14, 1
        %s237 = smul.addr %s236, 8
        %s238 = scalar_lea.vmem %s2, %s237
      $region40: #{tpu_custom_call.1} parent=35 // pred_fallthru
        _
    $region36: #{tpu_custom_call.1} parent=5 // pred_fallthru
      _
  $region6: #{tpu_custom_call.1} parent=0 // loop_footer
    %s12 = sadd.s32 1, %s8
  $region7: #{tpu_custom_call.1} parent=0 // loop_footer_branch
    %7 = sbr.rel target = $region3
  $region8: #{tpu_custom_call.1} parent=0 // loop_exit
    _

</llo_original>
